<compile_context>
chip_gen: v5e
topology: v5e:2x2
jax: 0.10.0
libtpu: 0.0.40
codegen_flags: <defaults>
</compile_context>

<pallas_src>
import functools

import jax
import jax.numpy as jnp
from jax.experimental import pallas as pl
from jax.experimental.pallas import tpu as pltpu


def _round_up(x: int, m: int) -> int:
    return (x + m - 1) // m * m


def _vmem_capacity_bytes() -> int:
    try:
        return int(pltpu.get_tpu_info().vmem_capacity_bytes)
    except Exception:
        return 64 << 20  # conservative default (v7x per-TC VMEM)


def _classifier_kernel(x_ref, w_ref, b_ref, o_ref, *, inv_temp):
    # x_ref: (TM, H), w_ref: (H, TN), b_ref: (1, TN), o_ref: (TM, TN)
    y = jnp.dot(x_ref[...], w_ref[...], preferred_element_type=jnp.float32)  # MXU
    y = (y + b_ref[...]) * inv_temp                                          # VPU
    o_ref[...] = y.astype(o_ref.dtype)


def classifier_forward(x, weight, bias, temp, grad_rev=True, eta=1.0,
                       out_dtype=None, return_padded=False):
    """Forward pass of Classifier.

    x:      (B, T, H)
    weight: (C, H)  (PyTorch nn.Linear layout: out_features x in_features)
    bias:   (C,)
    temp:   python float
    out_dtype: optional output dtype (e.g. jnp.bfloat16 to halve writeback);
               default matches x.dtype (PyTorch-equivalent).
    return_padded: if True, return (B, T, C_pad) and skip the column-slice pass.
    Returns (B, T, C) (or (B, T, C_pad) if return_padded).
    """
    # TODO(synk): grad_reverse only affects the backward pass (gradient * -eta);
    # forward is the identity, so no kernel work is required here.
    del grad_rev, eta

    B, T, H = x.shape
    C = weight.shape[0]
    BT = B * T
    out_dtype = x.dtype if out_dtype is None else jnp.dtype(out_dtype)

    x_bytes = x.dtype.itemsize
    w_bytes = weight.dtype.itemsize
    o_bytes = jnp.dtype(out_dtype).itemsize

    # Sublane alignment follows the streamed x dtype (bf16 packs 2 rows/sublane,
    # int8 packs 4).  We do NOT cast x in the wrapper (extra HBM pass).
    if x_bytes == 1:
        align = 32
    elif x_bytes == 2:
        align = 16
    else:
        align = 8

    C_pad = max(128, _round_up(C, 128))     # lane-dense output stores

    vmem_cap = _vmem_capacity_bytes()
    vmem_budget = int(vmem_cap * 0.75)      # headroom for Mosaic scratch etc.

    # ---- class-axis tiling: keep whole weight resident when it fits ----------
    w_full_bytes = H * C_pad * w_bytes
    if w_full_bytes <= vmem_budget // 4:
        TN = C_pad                          # single class tile, weight resident
    else:
        TN = 256 if (C_pad % 256 == 0) else 128   # 256 matches v6e/v7x MXU width
    n_tiles = C_pad // TN
    w_single = (n_tiles == 1)               # constant block index -> 1 buffer
    w_bufs = 1 if w_single else 2

    # ---- row-tile selection: derived from VMEM capacity ----------------------
    tm_cap = 1024 if vmem_cap >= (100 << 20) else 512   # bigger tiles on 128 MiB parts
    per_row_bytes = 2 * H * x_bytes + 2 * TN * o_bytes  # double-buffered x + out
    fixed_bytes = w_bufs * H * TN * w_bytes + 2 * TN * 4
    TM = max(align, _round_up(min(tm_cap, _round_up(BT, align)), align))
    while TM > align and fixed_bytes + TM * per_row_bytes > vmem_budget:
        TM = max(align, _round_up(TM // 2, align))
    # TODO(synk): if even TM == align does not fit (enormous H), add a K grid
    # axis with an f32 VMEM accumulator instead of shrinking TM further.

    n_rows = pl.cdiv(BT, TM)
    # v7x megacore: the row axis is sharded across 2 TensorCores; avoid a grid
    # of 1 and prefer an even tile count (neutral on single-TC v5e/v6e).
    if n_rows == 1 and BT > align:
        TM = max(align, _round_up(pl.cdiv(BT, 2), align))
        n_rows = pl.cdiv(BT, TM)
    elif n_rows > 1 and n_rows % 2 == 1:
        tm_even = max(align, _round_up(pl.cdiv(BT, n_rows + 1), align))
        if (fixed_bytes + tm_even * per_row_bytes <= vmem_budget
                and pl.cdiv(BT, tm_even) % 2 == 0):
            TM = tm_even
            n_rows = pl.cdiv(BT, TM)

    grid = (n_rows, n_tiles)

    # ---- parameter layout (tiny tensors only; the large activation tensor is
    # passed straight through: no pad, no cast) --------------------------------
    # NOTE: in a real model the padded+transposed weight should be cached as a
    # preprocessed parameter rather than rebuilt each call; it is tiny here.
    x2d = x.reshape(BT, H)
    w = jnp.pad(weight.T, ((0, 0), (0, C_pad - C)))           # (H, C_pad)
    b = jnp.pad(bias, (0, C_pad - C)).reshape(1, C_pad)        # (1, C_pad)

    vmem_needed = fixed_bytes + TM * per_row_bytes
    vmem_limit = int(min(max(vmem_needed + (2 << 20), 8 << 20), vmem_cap))

    w_reads = 1 if n_tiles == 1 else n_rows
    cost = pl.CostEstimate(
        flops=2 * BT * H * C_pad,
        transcendentals=0,
        bytes_accessed=(BT * H * x_bytes
                        + w_reads * H * C_pad * w_bytes
                        + C_pad * 4
                        + BT * C_pad * o_bytes),
    )

    kernel = functools.partial(_classifier_kernel, inv_temp=1.0 / float(temp))

    def build_and_call(use_single_buffer_params):
        param_kwargs = {}
        if use_single_buffer_params and w_single:
            # Constant block index: one buffer is enough (halves weight footprint).
            param_kwargs = dict(pipeline_mode=pl.Buffered(1))
        return pl.pallas_call(
            kernel,
            out_shape=jax.ShapeDtypeStruct((BT, C_pad), out_dtype),
            grid_spec=pltpu.PrefetchScalarGridSpec(
                num_scalar_prefetch=0,
                grid=grid,
                in_specs=[
                    pl.BlockSpec((TM, H), lambda i, j: (i, 0)),   # row-tiled activations
                    pl.BlockSpec((H, TN), lambda i, j: (0, j), **param_kwargs),
                    pl.BlockSpec((1, TN), lambda i, j: (0, j), **param_kwargs),
                ],
                out_specs=pl.BlockSpec((TM, TN), lambda i, j: (i, j)),
            ),
            compiler_params=pltpu.CompilerParams(
                dimension_semantics=("parallel", "parallel"),
                vmem_limit_bytes=vmem_limit,
            ),
            cost_estimate=cost,
        )(x2d, w, b)

    try:
        out2d = build_and_call(True)
    except Exception:
        # Fallback in case single-buffer pipeline_mode is rejected by this
        # Pallas/Mosaic version; identical semantics, default double-buffering.
        out2d = build_and_call(False)

    if return_padded:
        return out2d.reshape(B, T, C_pad)
    # NOTE: for tiny C this slice costs an extra HBM pass over the padded
    # logits; consumers that can handle padded logits should use return_padded.
    return out2d[:, :C].reshape(B, T, C)


if __name__ == "__main__":
    # Small shapes consistent with the module: (batch, seq, hidden) -> (batch, seq, classes)
    B, T, H, C = 2, 8, 32, 8
    temp = 0.05

    key = jax.random.PRNGKey(0)
    kx, kw, kb = jax.random.split(key, 3)

    x = jax.random.normal(kx, (B, T, H), dtype=jnp.float32)
    # Deterministic parameter init (mimics nn.Linear uniform(-1/sqrt(H), 1/sqrt(H)))
    bound = 1.0 / jnp.sqrt(jnp.float32(H))
    weight = jax.random.uniform(kw, (C, H), minval=-bound, maxval=bound, dtype=jnp.float32)
    bias = jax.random.uniform(kb, (C,), minval=-bound, maxval=bound, dtype=jnp.float32)

    y = classifier_forward(x, weight, bias, temp)
    y = jax.block_until_ready(y)

    # Reference check in plain JAX
    y_ref = (jnp.einsum("bth,ch->btc", x, weight) + bias) / temp
    assert y.shape == (B, T, C)
    assert jnp.allclose(y, y_ref, atol=1e-3, rtol=1e-4), "mismatch vs reference"

    print("KERNEL_OK")
</pallas_src>

<mosaic_0001>
module attributes {stable_mosaic.version = 11 : i64} {
  func.func @_classifier_kernel(%arg0: i32, %arg1: i32, %arg2: memref<8x32xf32, #tpu.memory_space<vmem>>, %arg3: memref<32x128xf32, #tpu.memory_space<vmem>>, %arg4: memref<1x128xf32, #tpu.memory_space<vmem>>, %arg5: memref<8x128xf32, #tpu.memory_space<vmem>>) attributes {dimension_semantics = [#tpu.dimension_semantics<parallel>, #tpu.dimension_semantics<parallel>], iteration_bounds = array<i64: 2, 1>, scalar_prefetch = 0 : i64, scratch_operands = 0 : i64, tpu.core_type = #tpu.core_type<tc>, window_params = [{transform_indices = @transform_0, window_bounds = array<i64: 8, 32>}, {pipeline_mode = #tpu.pipeline_mode<synchronous>, transform_indices = @transform_1, window_bounds = array<i64: 32, 128>}, {pipeline_mode = #tpu.pipeline_mode<synchronous>, transform_indices = @transform_2, window_bounds = array<i64: 1, 128>}, {transform_indices = @transform_3, window_bounds = array<i64: 8, 128>}]} {
    %c0 = arith.constant 0 : index
    %c0_0 = arith.constant 0 : index
    %0 = vector.load %arg2[%c0, %c0_0] : memref<8x32xf32, #tpu.memory_space<vmem>>, vector<8x32xf32>
    %c0_1 = arith.constant 0 : index
    %c0_2 = arith.constant 0 : index
    %1 = vector.load %arg3[%c0_1, %c0_2] : memref<32x128xf32, #tpu.memory_space<vmem>>, vector<32x128xf32>
    %cst = arith.constant dense<0.000000e+00> : vector<8x128xf32>
    %2 = tpu.matmul %0, %1, %cst {dimension_numbers = #tpu.dot_dimension_numbers<[1], [0], [0], [1], [0, 0, 1, 1], [], []>} : vector<8x32xf32>, vector<32x128xf32>, vector<8x128xf32> -> vector<8x128xf32>
    %c0_3 = arith.constant 0 : index
    %c0_4 = arith.constant 0 : index
    %3 = vector.load %arg4[%c0_3, %c0_4] : memref<1x128xf32, #tpu.memory_space<vmem>>, vector<1x128xf32>
    %4 = vector.broadcast %3 : vector<1x128xf32> to vector<8x128xf32>
    %5 = arith.addf %2, %4 : vector<8x128xf32>
    %cst_5 = arith.constant 2.000000e+01 : f32
    %6 = vector.broadcast %cst_5 : f32 to vector<8x128xf32>
    %7 = arith.mulf %5, %6 : vector<8x128xf32>
    %c0_6 = arith.constant 0 : index
    %c0_7 = arith.constant 0 : index
    %8 = vector.load %arg5[%c0_6, %c0_7] : memref<8x128xf32, #tpu.memory_space<vmem>>, vector<8x128xf32>
    tpu.vector_store %arg5[%c0_6, %c0_7], %7 {strides = array<i32>} : memref<8x128xf32, #tpu.memory_space<vmem>>, vector<8x128xf32>,
    return
  }
  func.func @transform_0(%arg0: i32, %arg1: i32) -> (i32, i32) {
    %c0_i32 = arith.constant 0 : i32
    %c0_i32_0 = arith.constant 0 : i32
    return %arg0, %c0_i32 : i32, i32
  }
  func.func @transform_1(%arg0: i32, %arg1: i32) -> (i32, i32) {
    %c0_i32 = arith.constant 0 : i32
    %c0_i32_0 = arith.constant 0 : i32
    return %c0_i32, %arg1 : i32, i32
  }
  func.func @transform_2(%arg0: i32, %arg1: i32) -> (i32, i32) {
    %c0_i32 = arith.constant 0 : i32
    %c0_i32_0 = arith.constant 0 : i32
    return %c0_i32, %arg1 : i32, i32
  }
  func.func @transform_3(%arg0: i32, %arg1: i32) -> (i32, i32) {
    %c0_i32 = arith.constant 0 : i32
    return %arg0, %arg1 : i32, i32
  }
}

module attributes {stable_mosaic.version = 11 : i64} {
  func.func @_classifier_kernel(%arg0: i32, %arg1: i32, %arg2: memref<8x32xf32, #tpu.memory_space<vmem>>, %arg3: memref<32x128xf32, #tpu.memory_space<vmem>>, %arg4: memref<1x128xf32, #tpu.memory_space<vmem>>, %arg5: memref<8x128xf32, #tpu.memory_space<vmem>>) attributes {dimension_semantics = [#tpu.dimension_semantics<parallel>, #tpu.dimension_semantics<parallel>], iteration_bounds = array<i64: 2, 1>, scalar_prefetch = 0 : i64, scratch_operands = 0 : i64, tpu.core_type = #tpu.core_type<tc>, window_params = [{transform_indices = @transform_0, window_bounds = array<i64: 8, 32>}, {transform_indices = @transform_1, window_bounds = array<i64: 32, 128>}, {transform_indices = @transform_2, window_bounds = array<i64: 1, 128>}, {transform_indices = @transform_3, window_bounds = array<i64: 8, 128>}]} {
    %c0 = arith.constant 0 : index
    %c0_0 = arith.constant 0 : index
    %0 = vector.load %arg2[%c0, %c0_0] : memref<8x32xf32, #tpu.memory_space<vmem>>, vector<8x32xf32>
    %c0_1 = arith.constant 0 : index
    %c0_2 = arith.constant 0 : index
    %1 = vector.load %arg3[%c0_1, %c0_2] : memref<32x128xf32, #tpu.memory_space<vmem>>, vector<32x128xf32>
    %cst = arith.constant dense<0.000000e+00> : vector<8x128xf32>
    %2 = tpu.matmul %0, %1, %cst {dimension_numbers = #tpu.dot_dimension_numbers<[1], [0], [0], [1], [0, 0, 1, 1], [], []>} : vector<8x32xf32>, vector<32x128xf32>, vector<8x128xf32> -> vector<8x128xf32>
    %c0_3 = arith.constant 0 : index
    %c0_4 = arith.constant 0 : index
    %3 = vector.load %arg4[%c0_3, %c0_4] : memref<1x128xf32, #tpu.memory_space<vmem>>, vector<1x128xf32>
    %4 = vector.broadcast %3 : vector<1x128xf32> to vector<8x128xf32>
    %5 = arith.addf %2, %4 : vector<8x128xf32>
    %cst_5 = arith.constant 2.000000e+01 : f32
    %6 = vector.broadcast %cst_5 : f32 to vector<8x128xf32>
    %7 = arith.mulf %5, %6 : vector<8x128xf32>
    %c0_6 = arith.constant 0 : index
    %c0_7 = arith.constant 0 : index
    %8 = vector.load %arg5[%c0_6, %c0_7] : memref<8x128xf32, #tpu.memory_space<vmem>>, vector<8x128xf32>
    tpu.vector_store %arg5[%c0_6, %c0_7], %7 {strides = array<i32>} : memref<8x128xf32, #tpu.memory_space<vmem>>, vector<8x128xf32>,
    return
  }
  func.func @transform_0(%arg0: i32, %arg1: i32) -> (i32, i32) {
    %c0_i32 = arith.constant 0 : i32
    %c0_i32_0 = arith.constant 0 : i32
    return %arg0, %c0_i32 : i32, i32
  }
  func.func @transform_1(%arg0: i32, %arg1: i32) -> (i32, i32) {
    %c0_i32 = arith.constant 0 : i32
    %c0_i32_0 = arith.constant 0 : i32
    return %c0_i32, %arg1 : i32, i32
  }
  func.func @transform_2(%arg0: i32, %arg1: i32) -> (i32, i32) {
    %c0_i32 = arith.constant 0 : i32
    %c0_i32_0 = arith.constant 0 : i32
    return %c0_i32, %arg1 : i32, i32
  }
  func.func @transform_3(%arg0: i32, %arg1: i32) -> (i32, i32) {
    %c0_i32 = arith.constant 0 : i32
    return %arg0, %arg1 : i32, i32
  }
}

</mosaic_0001>

<llo_original>
// kernel: tpu_custom_call.1
$region0: #{tpu_custom_call.1}
  #allocation0 [shape = 'u32[]', space=smem, size = 0x4, offset = 0x4, fixed_abs, tag = 'smem constant byte address 0x4 - core index']
  #allocation1 [shape = 'u32[72,128]{1,0:T(1,128)}', space=vmem, size = 0x9000, scoped, tag = 'internal scratch']
  %s0 = inlined_call_operand.hbm [shape: f32[16,32], index: 0, kind: input, shape index: {}]
  %s1 = inlined_call_operand.hbm [shape: f32[32,128], index: 1, kind: input, shape index: {}]
  %s2 = inlined_call_operand.vmem [shape: f32[1,128], index: 2, kind: input, shape index: {}]
  %s3 = inlined_call_operand.hbm [shape: f32[16,128], index: 3, kind: output, shape index: {}]
  %s4 = sld [smem:[#allocation0]]
  $region53: #{tpu_custom_call.1} parent=0
    _
  %s6 = ssub.s32 1, %s4
  %s7 = scalar_select 0, %s6, %s4
  $region1: #{tpu_custom_call.1} parent=0
    #allocation2 [shape = 'u8[8192]{0}', space=vmem, size = 0x2000, scoped, tag = 'input window, operand 0']
    #allocation3 [shape = 's32[2]{0}', space=sflag, size = 0x8, scoped, tag = 'scoped memory for tpu_custom_call.1']
    #allocation4 [shape = 's32[2]{0}', space=sflag, size = 0x8, scoped, tag = 'scoped memory for tpu_custom_call.1']
    #allocation5 [shape = 'u8[16384]{0}', space=vmem, size = 0x4000, scoped, tag = 'input window, operand 1, single buffered']
    #allocation6 [shape = 's32[1]{0}', space=sflag, size = 0x4, scoped, tag = 'scoped memory for tpu_custom_call.1']
    #allocation7 [shape = 'u8[8192]{0}', space=vmem, size = 0x2000, scoped, tag = 'output window, operand 0']
    %8 = vsyncpa [#allocation3], 0
    %s9 = scalar_lea.sflag [#allocation3], 1
    %10 = vsyncpa %s9, 0
    %11 = vsyncpa [#allocation6], 0
    %12 = vsyncpa [#allocation4], 0
    %s13 = scalar_lea.sflag [#allocation4], 1
    %14 = vsyncpa %s13, 0
    loop: start=0, step=1, limit=4
    $region2: #{tpu_custom_call.1} parent=1 // loop_pre_header
      _
    $region3: #{tpu_custom_call.1} parent=1 // loop_header
      %s16 = sphi 0, %s20
      %p17 = scmp.ge.s32.totalorder %s16, 4
      %s23 = sphi 0, %s35
      %s24 = sphi 0, %s31
      %s25 = sphi 0, %s23
      %s26 = sphi 0, %s24
      %s27 = sphi 0, %s25
      %s28 = sphi 0, %s26
      %s38 = sphi 0, %s40
      %s41 = sphi 0, %s38
      %s42 = sphi 0, %s41
      %s58 = sphi 0, %s42
      %s64 = sphi 0, %s66
      %s67 = sphi 0, %s64
      %s68 = sphi 0, %s67
      %s84 = sphi 0, %s68
      %s90 = sphi 0, %s92
      %s93 = sphi 0, %s90
      %s94 = sphi 0, %s93
      %s110 = sphi 0, %s94
      %s118 = sphi 0, %s120
      %s121 = sphi 0, %s118
      %s122 = sphi 0, %s121
      %s138 = sphi 0, %s122
    $region4: #{tpu_custom_call.1} parent=1 // loop_header_branch
      %19 = sbr.rel (%p17) target = $region8
    $region5: #{tpu_custom_call.1} parent=1 // loop_body
      %s21 = ssub.s32 %s16, 1
      %s22 = ssub.s32 %s16, 2
      %s29 = sadd.s32 1, %s24
      %p30 = scmp.ge.s32.totalorder %s29, 1
      %s31 = scalar_select %p30, 0, %s29
      %s32 = sadd.s32 1, %s23
      %s33 = scalar_select %p30, %s32, %s23
      %p34 = scmp.ge.s32.totalorder %s33, 2
      %s35 = scalar_select %p34, 0, %s33
      %s36 = ssub.s32 %s23, %s35
      %p37 = scmp.eq.s32.totalorder %s36, 0
      %s39 = sadd.s32 %s38, 1
      %s40 = scalar_select %p37, %s38, %s39
      %p43 = pneg %p37
      %p44 = scmp.eq.s32.totalorder %s16, 1
      %p45 = por %p43, %p44
      %p46 = scmp.ne.s32.totalorder %s38, %s41
      %p47 = scmp.eq.s32.totalorder %s16, 0
      %p48 = por %p46, %p47
      %p49 = scmp.ne.s32.totalorder %s38, %s41
      %p50 = scmp.eq.s32.totalorder %s21, 1
      %p51 = por %p49, %p50
      %p52 = scmp.ne.s32.totalorder %s41, %s42
      %p53 = scmp.eq.s32.totalorder %s21, 0
      %p54 = por %p52, %p53
      %p55 = scmp.ne.s32.totalorder %s41, %s42
      %p56 = scmp.eq.s32.totalorder %s22, 1
      %p57 = por %p55, %p56
      %p59 = scmp.ne.s32.totalorder %s42, %s58
      %p60 = scmp.eq.s32.totalorder %s22, 0
      %p61 = por %p59, %p60
      %s62 = ssub.s32 %s24, %s31
      %p63 = scmp.eq.s32.totalorder %s62, 0
      %s65 = sadd.s32 %s64, 1
      %s66 = scalar_select %p63, %s64, %s65
      %p69 = pneg %p63
      %p70 = scmp.eq.s32.totalorder %s16, 1
      %p71 = por %p69, %p70
      %p72 = scmp.ne.s32.totalorder %s64, %s67
      %p73 = scmp.eq.s32.totalorder %s16, 0
      %p74 = por %p72, %p73
      %p75 = scmp.ne.s32.totalorder %s64, %s67
      %p76 = scmp.eq.s32.totalorder %s21, 1
      %p77 = por %p75, %p76
      %p78 = scmp.ne.s32.totalorder %s67, %s68
      %p79 = scmp.eq.s32.totalorder %s21, 0
      %p80 = por %p78, %p79
      %p81 = scmp.ne.s32.totalorder %s67, %s68
      %p82 = scmp.eq.s32.totalorder %s22, 1
      %p83 = por %p81, %p82
      %p85 = scmp.ne.s32.totalorder %s68, %s84
      %p86 = scmp.eq.s32.totalorder %s22, 0
      %p87 = por %p85, %p86
      %s88 = ssub.s32 %s24, %s31
      %p89 = scmp.eq.s32.totalorder %s88, 0
      %s91 = sadd.s32 %s90, 1
      %s92 = scalar_select %p89, %s90, %s91
      %p95 = pneg %p89
      %p96 = scmp.eq.s32.totalorder %s16, 1
      %p97 = por %p95, %p96
      %p98 = scmp.ne.s32.totalorder %s90, %s93
      %p99 = scmp.eq.s32.totalorder %s16, 0
      %p100 = por %p98, %p99
      %p101 = scmp.ne.s32.totalorder %s90, %s93
      %p102 = scmp.eq.s32.totalorder %s21, 1
      %p103 = por %p101, %p102
      %p104 = scmp.ne.s32.totalorder %s93, %s94
      %p105 = scmp.eq.s32.totalorder %s21, 0
      %p106 = por %p104, %p105
      %p107 = scmp.ne.s32.totalorder %s93, %s94
      %p108 = scmp.eq.s32.totalorder %s22, 1
      %p109 = por %p107, %p108
      %p111 = scmp.ne.s32.totalorder %s94, %s110
      %p112 = scmp.eq.s32.totalorder %s22, 0
      %p113 = por %p111, %p112
      %s114 = ssub.s32 %s23, %s35
      %s115 = ssub.s32 %s24, %s31
      %s116 = sor.u32 %s114, %s115
      %p117 = scmp.eq.s32.totalorder %s116, 0
      %s119 = sadd.s32 %s118, 1
      %s120 = scalar_select %p117, %s118, %s119
      %p123 = pneg %p117
      %p124 = scmp.eq.s32.totalorder %s16, 1
      %p125 = por %p123, %p124
      %p126 = scmp.ne.s32.totalorder %s118, %s121
      %p127 = scmp.eq.s32.totalorder %s16, 0
      %p128 = por %p126, %p127
      %p129 = scmp.ne.s32.totalorder %s118, %s121
      %p130 = scmp.eq.s32.totalorder %s21, 1
      %p131 = por %p129, %p130
      %p132 = scmp.ne.s32.totalorder %s121, %s122
      %p133 = scmp.eq.s32.totalorder %s21, 0
      %p134 = por %p132, %p133
      %p135 = scmp.ne.s32.totalorder %s121, %s122
      %p136 = scmp.eq.s32.totalorder %s22, 1
      %p137 = por %p135, %p136
      %p139 = scmp.ne.s32.totalorder %s122, %s138
      %p140 = scmp.eq.s32.totalorder %s22, 0
      %p141 = por %p139, %p140
      %p142 = scmp.le.s32.totalorder 1, %s16
      %p143 = scmp.lt.s32.totalorder %s16, 3
      %p144 = pnand %p142, %p143
      %p145 = pneg %p144
      // Predicated region
      $region9: #{tpu_custom_call.1} parent=5 // pred_check
        _
      $region10: #{tpu_custom_call.1} parent=5 // pred_check_branch
        %147 = sbr.rel (%p144) target = $region12
      $region11: #{tpu_custom_call.1} parent=5 // pred_region
        %s148 = ssub.s32 %s16, 1
        // Predicated region
        $region13: #{tpu_custom_call.1} parent=11 // pred_check
          %p149 = pneg %p80
        $region14: #{tpu_custom_call.1} parent=11 // pred_check_branch
          %151 = sbr.rel (%p149) target = $region16
        $region15: #{tpu_custom_call.1} parent=11 // pred_region
          %153 = vsyncadd [#allocation6], 0
          %s154 = smul.addr %s26, 8
          %s155 = scalar_lea.hbm %s1, %s154
          %s156 = sshll.u32 %s155, 4
          %s157 = int_to_ptr.hbm [resolvable:$true] %s156
          %s158 = sshll.u32 [#allocation5], 4
          %s159 = int_to_ptr.vmem [resolvable:$true] %s158
          %164 = dma.hbm_to_vmem [thread:$0]  %s157, 512, %s159, [#allocation6], 128, 128, 8
        $region16: #{tpu_custom_call.1} parent=11 // pred_fallthru
          _
        // Predicated region
        $region17: #{tpu_custom_call.1} parent=11 // pred_check
          %p165 = pneg %p106
        $region18: #{tpu_custom_call.1} parent=11 // pred_check_branch
          %167 = sbr.rel (%p165) target = $region20
        $region19: #{tpu_custom_call.1} parent=11 // pred_region
          %p168 = scmp.lt.s32.totalorder %s26, 0
          %s169 = scalar_select %p168, %s26, 0
          %s170 = scalar_lea.vmem %s2, %s169
        $region20: #{tpu_custom_call.1} parent=11 // pred_fallthru
          _
      $region12: #{tpu_custom_call.1} parent=5 // pred_fallthru
        _
      %p171 = scmp.lt.s32.totalorder %s16, 2
      // Predicated region
      $region21: #{tpu_custom_call.1} parent=5 // pred_check
        %p172 = pneg %p171
      $region22: #{tpu_custom_call.1} parent=5 // pred_check_branch
        %174 = sbr.rel (%p172) target = $region24
      $region23: #{tpu_custom_call.1} parent=5 // pred_region
        // Predicated region
        $region25: #{tpu_custom_call.1} parent=23 // pred_check
          %p175 = pneg %p48
        $region26: #{tpu_custom_call.1} parent=23 // pred_check_branch
          %177 = sbr.rel (%p175) target = $region28
        $region27: #{tpu_custom_call.1} parent=23 // pred_region
          %s178 = sand.u32 %s38, 1
          %s179 = scalar_lea.sflag [#allocation3], %s178
          %s180 = sand.u32 %s38, 1
          %s181 = smul.addr %s180, 8
          %s182 = scalar_lea.vmem [#allocation2], %s181
          %184 = vsyncadd %s179, 0
          %s185 = smul.addr %s23, 8
          %s186 = scalar_lea.hbm %s0, %s185
          %s188 = sshll.u32 %s186, 4
          %s189 = int_to_ptr.hbm [resolvable:$true] %s188
          %s190 = sshll.u32 %s182, 4
          %s191 = int_to_ptr.vmem [resolvable:$true] %s190
          %193 = dma.hbm_to_vmem [thread:$0]  %s189, 128, %s191, %s179
        $region28: #{tpu_custom_call.1} parent=23 // pred_fallthru
          _
      $region24: #{tpu_custom_call.1} parent=5 // pred_fallthru
        _
      %p194 = scmp.le.s32.totalorder 1, %s16
      %p195 = scmp.lt.s32.totalorder %s16, 3
      %p196 = pnand %p194, %p195
      %p197 = pneg %p196
      // Predicated region
      $region29: #{tpu_custom_call.1} parent=5 // pred_check
        _
      $region30: #{tpu_custom_call.1} parent=5 // pred_check_branch
        %199 = sbr.rel (%p196) target = $region32
      $region31: #{tpu_custom_call.1} parent=5 // pred_region
        %s200 = ssub.s32 %s16, 1
        %s201 = sand.u32 %s41, 1
        %s202 = scalar_lea.sflag [#allocation3], %s201
        %s203 = sand.u32 %s41, 1
        %s204 = smul.addr %s203, 8
        %s205 = scalar_lea.vmem [#allocation2], %s204
        // Predicated region
        $region33: #{tpu_custom_call.1} parent=31 // pred_check
          %p206 = pneg %p54
        $region34: #{tpu_custom_call.1} parent=31 // pred_check_branch
          %208 = sbr.rel (%p206) target = $region36
        $region35: #{tpu_custom_call.1} parent=31 // pred_region
          %210 = dma.done %s202, 128
        $region36: #{tpu_custom_call.1} parent=31 // pred_fallthru
          _
        // Predicated region
        $region37: #{tpu_custom_call.1} parent=31 // pred_check
          %p211 = pneg %p80
        $region38: #{tpu_custom_call.1} parent=31 // pred_check_branch
          %213 = sbr.rel (%p211) target = $region40
        $region39: #{tpu_custom_call.1} parent=31 // pred_region
          %215 = dma.done [#allocation6], 512
        $region40: #{tpu_custom_call.1} parent=31 // pred_fallthru
          _
        %s216 = sand.u32 %s41, 1
        %s217 = scalar_lea.sflag [#allocation3], %s216
        %s218 = sand.u32 %s41, 1
        %s219 = smul.addr %s218, 8
        %s220 = scalar_lea.vmem [#allocation2], %s219
        %p221 = pneg %p54
        %p222 = pneg %p51
        %p223 = pneg %p80
        %p224 = pneg %p77
        %p225 = scmp.lt.s32.totalorder %s26, 0
        %s226 = scalar_select %p225, %s26, 0
        %s227 = scalar_lea.vmem %s2, %s226
        %p228 = pneg %p106
        %p229 = pneg %p103
        %p230 = pneg %p134
        %p231 = pneg %p131
        %s232 = sand.u32 %s121, 1
        %s233 = scalar_lea.sflag [#allocation4], %s232
        %s234 = sand.u32 %s121, 1
        %s235 = smul.addr %s234, 8
        %s236 = scalar_lea.vmem [#allocation7], %s235
        %p237 = scmp.lt.s32.totalorder %s26, 0
        %s238 = scalar_select %p237, %s26, 0
        %s239 = scalar_lea.vmem %s2, %s238
        %v240 = vld [vmem:[%s205] sm:$0xff]
        %v241 = vld [vmem:[#allocation5] sm:$0xff]
        %v242 = vld [vmem:[#allocation5 + $0x8] sm:$0xff]
        %v243 = vld [vmem:[#allocation5 + $0x10] sm:$0xff]
        %v244 = vld [vmem:[#allocation5 + $0x18] sm:$0xff]
        %v245 = vld [vmem:[%s239] sm:$0x1]
        %v247 = vperm.slane %v245, 0
        %vm249 = vcmask 261120
        %v251 = vsel %vm249, %v240, 0
        %253 = vmatpush.msra.mxu0 0.0
        %254 = vmatpush.msra.mxu0 0.0
        %255 = vmatpush.msra.mxu0 0.0
        %256 = vmatpush.msra.mxu0 0.0
        %257 = vmatpush.msra.mxu0 0.0
        %258 = vmatpush.msra.mxu0 0.0
        %259 = vmatpush.msra.mxu0 0.0
        %260 = vmatpush.msra.mxu0 0.0
        %261 = vmatpush.msra.mxu0 0.0
        %262 = vmatpush.msra.mxu0 0.0
        %263 = vmatpush.msra.mxu0 0.0
        %264 = vmatpush.msra.mxu0 0.0
        %265 = vmatpush.msra.mxu0 %v244
        %266 = vmatpush.msra.mxu0 %v243
        %267 = vmatpush.msra.mxu0 %v242
        %268 = vmatpush.msra.mxu0 %v241
        %269 = vmatmul.f32.gmra.mxu0 %v251
        %v270 = vpop.f32.mrf.mxu0
        %v271 = vadd.f32 %v247, %v270
        %272 = vdwg.mxu0
        %v273 = vmul.f32 %v271, 20.0
        %274 = vst [vmem:[%s236] sm:$0xff] %v273
        %s275 = sand.u32 %s121, 1
        %s276 = scalar_lea.sflag [#allocation4], %s275
        %s277 = sand.u32 %s121, 1
        %s278 = smul.addr %s277, 8
        %s279 = scalar_lea.vmem [#allocation7], %s278
        // Predicated region
        $region41: #{tpu_custom_call.1} parent=31 // pred_check
          %p280 = pneg %p131
        $region42: #{tpu_custom_call.1} parent=31 // pred_check_branch
          %282 = sbr.rel (%p280) target = $region44
        $region43: #{tpu_custom_call.1} parent=31 // pred_region
          %284 = vsyncadd %s276, 0
          %s285 = sadd.s32 %s26, %s25
          %s286 = smul.addr %s285, 8
          %s287 = scalar_lea.hbm %s3, %s286
          %s289 = sshll.u32 %s279, 4
          %s290 = int_to_ptr.vmem [resolvable:$true] %s289
          %s291 = sshll.u32 %s287, 4
          %s292 = int_to_ptr.hbm [resolvable:$true] %s291
          %294 = dma.vmem_to_hbm [thread:$0]  %s290, 128, %s292, %s276
        $region44: #{tpu_custom_call.1} parent=31 // pred_fallthru
          _
      $region32: #{tpu_custom_call.1} parent=5 // pred_fallthru
        _
      %p295 = scmp.le.s32.totalorder 2, %s16
      // Predicated region
      $region45: #{tpu_custom_call.1} parent=5 // pred_check
        %p296 = pneg %p295
      $region46: #{tpu_custom_call.1} parent=5 // pred_check_branch
        %298 = sbr.rel (%p296) target = $region48
      $region47: #{tpu_custom_call.1} parent=5 // pred_region
        %s299 = ssub.s32 %s16, 2
        // Predicated region
        $region49: #{tpu_custom_call.1} parent=47 // pred_check
          %p300 = pneg %p137
        $region50: #{tpu_custom_call.1} parent=47 // pred_check_branch
          %302 = sbr.rel (%p300) target = $region52
        $region51: #{tpu_custom_call.1} parent=47 // pred_region
          %s303 = sand.u32 %s122, 1
          %s304 = scalar_lea.sflag [#allocation4], %s303
          %s305 = sand.u32 %s122, 1
          %s306 = smul.addr %s305, 8
          %s307 = scalar_lea.vmem [#allocation7], %s306
          %309 = dma.done %s304, 128
        $region52: #{tpu_custom_call.1} parent=47 // pred_fallthru
          _
      $region48: #{tpu_custom_call.1} parent=5 // pred_fallthru
        _
    $region6: #{tpu_custom_call.1} parent=1 // loop_footer
      %s20 = sadd.s32 1, %s16
    $region7: #{tpu_custom_call.1} parent=1 // loop_footer_branch
      %15 = sbr.rel target = $region3
    $region8: #{tpu_custom_call.1} parent=1 // loop_exit
      _
    %310 = vsyncpa [#allocation3], 1
    %s311 = scalar_lea.sflag [#allocation3], 1
    %312 = vsyncpa %s311, 1
    %313 = vsyncpa [#allocation6], 1
    %314 = vsyncpa [#allocation4], 1
    %s315 = scalar_lea.sflag [#allocation4], 1
    %316 = vsyncpa %s315, 1

// kernel: tpu_custom_call.1
$region0: #{tpu_custom_call.1}
  #allocation0 [shape = 'u32[]', space=smem, size = 0x4, offset = 0x4, fixed_abs, tag = 'smem constant byte address 0x4 - core index']
  #allocation1 [shape = 'u32[72,128]{1,0:T(1,128)}', space=vmem, size = 0x9000, scoped, tag = 'internal scratch']
  %s0 = inlined_call_operand.hbm [shape: f32[16,32], index: 0, kind: input, shape index: {}]
  %s1 = inlined_call_operand.hbm [shape: f32[32,128], index: 1, kind: input, shape index: {}]
  %s2 = inlined_call_operand.vmem [shape: f32[1,128], index: 2, kind: input, shape index: {}]
  %s3 = inlined_call_operand.hbm [shape: f32[16,128], index: 3, kind: output, shape index: {}]
  %s4 = sld [smem:[#allocation0]]
  $region53: #{tpu_custom_call.1} parent=0
    _
  %s6 = ssub.s32 1, %s4
  %s7 = scalar_select 0, %s6, %s4
  $region1: #{tpu_custom_call.1} parent=0
    #allocation2 [shape = 'u8[8192]{0}', space=vmem, size = 0x2000, scoped, tag = 'input window, operand 0']
    #allocation3 [shape = 's32[2]{0}', space=sflag, size = 0x8, scoped, tag = 'scoped memory for tpu_custom_call.1']
    #allocation4 [shape = 's32[2]{0}', space=sflag, size = 0x8, scoped, tag = 'scoped memory for tpu_custom_call.1']
    #allocation5 [shape = 'u8[16384]{0}', space=vmem, size = 0x4000, scoped, tag = 'input window, operand 1, single buffered']
    #allocation6 [shape = 's32[1]{0}', space=sflag, size = 0x4, scoped, tag = 'scoped memory for tpu_custom_call.1']
    #allocation7 [shape = 'u8[8192]{0}', space=vmem, size = 0x2000, scoped, tag = 'output window, operand 0']
    %8 = vsyncpa [#allocation3], 0
    %s9 = scalar_lea.sflag [#allocation3], 1
    %10 = vsyncpa %s9, 0
    %11 = vsyncpa [#allocation6], 0
    %12 = vsyncpa [#allocation4], 0
    %s13 = scalar_lea.sflag [#allocation4], 1
    %14 = vsyncpa %s13, 0
    loop: start=0, step=1, limit=4
    $region2: #{tpu_custom_call.1} parent=1 // loop_pre_header
      _
    $region3: #{tpu_custom_call.1} parent=1 // loop_header
      %s16 = sphi 0, %s20
      %p17 = scmp.ge.s32.totalorder %s16, 4
      %s23 = sphi 0, %s35
      %s24 = sphi 0, %s31
      %s25 = sphi 0, %s23
      %s26 = sphi 0, %s24
      %s27 = sphi 0, %s25
      %s28 = sphi 0, %s26
      %s38 = sphi 0, %s40
      %s41 = sphi 0, %s38
      %s42 = sphi 0, %s41
      %s58 = sphi 0, %s42
      %s64 = sphi 0, %s66
      %s67 = sphi 0, %s64
      %s68 = sphi 0, %s67
      %s84 = sphi 0, %s68
      %s90 = sphi 0, %s92
      %s93 = sphi 0, %s90
      %s94 = sphi 0, %s93
      %s110 = sphi 0, %s94
      %s118 = sphi 0, %s120
      %s121 = sphi 0, %s118
      %s122 = sphi 0, %s121
      %s138 = sphi 0, %s122
    $region4: #{tpu_custom_call.1} parent=1 // loop_header_branch
      %19 = sbr.rel (%p17) target = $region8
    $region5: #{tpu_custom_call.1} parent=1 // loop_body
      %s21 = ssub.s32 %s16, 1
      %s22 = ssub.s32 %s16, 2
      %s29 = sadd.s32 1, %s24
      %p30 = scmp.ge.s32.totalorder %s29, 1
      %s31 = scalar_select %p30, 0, %s29
      %s32 = sadd.s32 1, %s23
      %s33 = scalar_select %p30, %s32, %s23
      %p34 = scmp.ge.s32.totalorder %s33, 2
      %s35 = scalar_select %p34, 0, %s33
      %s36 = ssub.s32 %s23, %s35
      %p37 = scmp.eq.s32.totalorder %s36, 0
      %s39 = sadd.s32 %s38, 1
      %s40 = scalar_select %p37, %s38, %s39
      %p43 = pneg %p37
      %p44 = scmp.eq.s32.totalorder %s16, 1
      %p45 = por %p43, %p44
      %p46 = scmp.ne.s32.totalorder %s38, %s41
      %p47 = scmp.eq.s32.totalorder %s16, 0
      %p48 = por %p46, %p47
      %p49 = scmp.ne.s32.totalorder %s38, %s41
      %p50 = scmp.eq.s32.totalorder %s21, 1
      %p51 = por %p49, %p50
      %p52 = scmp.ne.s32.totalorder %s41, %s42
      %p53 = scmp.eq.s32.totalorder %s21, 0
      %p54 = por %p52, %p53
      %p55 = scmp.ne.s32.totalorder %s41, %s42
      %p56 = scmp.eq.s32.totalorder %s22, 1
      %p57 = por %p55, %p56
      %p59 = scmp.ne.s32.totalorder %s42, %s58
      %p60 = scmp.eq.s32.totalorder %s22, 0
      %p61 = por %p59, %p60
      %s62 = ssub.s32 %s24, %s31
      %p63 = scmp.eq.s32.totalorder %s62, 0
      %s65 = sadd.s32 %s64, 1
      %s66 = scalar_select %p63, %s64, %s65
      %p69 = pneg %p63
      %p70 = scmp.eq.s32.totalorder %s16, 1
      %p71 = por %p69, %p70
      %p72 = scmp.ne.s32.totalorder %s64, %s67
      %p73 = scmp.eq.s32.totalorder %s16, 0
      %p74 = por %p72, %p73
      %p75 = scmp.ne.s32.totalorder %s64, %s67
      %p76 = scmp.eq.s32.totalorder %s21, 1
      %p77 = por %p75, %p76
      %p78 = scmp.ne.s32.totalorder %s67, %s68
      %p79 = scmp.eq.s32.totalorder %s21, 0
      %p80 = por %p78, %p79
      %p81 = scmp.ne.s32.totalorder %s67, %s68
      %p82 = scmp.eq.s32.totalorder %s22, 1
      %p83 = por %p81, %p82
      %p85 = scmp.ne.s32.totalorder %s68, %s84
      %p86 = scmp.eq.s32.totalorder %s22, 0
      %p87 = por %p85, %p86
      %s88 = ssub.s32 %s24, %s31
      %p89 = scmp.eq.s32.totalorder %s88, 0
      %s91 = sadd.s32 %s90, 1
      %s92 = scalar_select %p89, %s90, %s91
      %p95 = pneg %p89
      %p96 = scmp.eq.s32.totalorder %s16, 1
      %p97 = por %p95, %p96
      %p98 = scmp.ne.s32.totalorder %s90, %s93
      %p99 = scmp.eq.s32.totalorder %s16, 0
      %p100 = por %p98, %p99
      %p101 = scmp.ne.s32.totalorder %s90, %s93
      %p102 = scmp.eq.s32.totalorder %s21, 1
      %p103 = por %p101, %p102
      %p104 = scmp.ne.s32.totalorder %s93, %s94
      %p105 = scmp.eq.s32.totalorder %s21, 0
      %p106 = por %p104, %p105
      %p107 = scmp.ne.s32.totalorder %s93, %s94
      %p108 = scmp.eq.s32.totalorder %s22, 1
      %p109 = por %p107, %p108
      %p111 = scmp.ne.s32.totalorder %s94, %s110
      %p112 = scmp.eq.s32.totalorder %s22, 0
      %p113 = por %p111, %p112
      %s114 = ssub.s32 %s23, %s35
      %s115 = ssub.s32 %s24, %s31
      %s116 = sor.u32 %s114, %s115
      %p117 = scmp.eq.s32.totalorder %s116, 0
      %s119 = sadd.s32 %s118, 1
      %s120 = scalar_select %p117, %s118, %s119
      %p123 = pneg %p117
      %p124 = scmp.eq.s32.totalorder %s16, 1
      %p125 = por %p123, %p124
      %p126 = scmp.ne.s32.totalorder %s118, %s121
      %p127 = scmp.eq.s32.totalorder %s16, 0
      %p128 = por %p126, %p127
      %p129 = scmp.ne.s32.totalorder %s118, %s121
      %p130 = scmp.eq.s32.totalorder %s21, 1
      %p131 = por %p129, %p130
      %p132 = scmp.ne.s32.totalorder %s121, %s122
      %p133 = scmp.eq.s32.totalorder %s21, 0
      %p134 = por %p132, %p133
      %p135 = scmp.ne.s32.totalorder %s121, %s122
      %p136 = scmp.eq.s32.totalorder %s22, 1
      %p137 = por %p135, %p136
      %p139 = scmp.ne.s32.totalorder %s122, %s138
      %p140 = scmp.eq.s32.totalorder %s22, 0
      %p141 = por %p139, %p140
      %p142 = scmp.le.s32.totalorder 1, %s16
      %p143 = scmp.lt.s32.totalorder %s16, 3
      %p144 = pnand %p142, %p143
      %p145 = pneg %p144
      // Predicated region
      $region9: #{tpu_custom_call.1} parent=5 // pred_check
        _
      $region10: #{tpu_custom_call.1} parent=5 // pred_check_branch
        %147 = sbr.rel (%p144) target = $region12
      $region11: #{tpu_custom_call.1} parent=5 // pred_region
        %s148 = ssub.s32 %s16, 1
        // Predicated region
        $region13: #{tpu_custom_call.1} parent=11 // pred_check
          %p149 = pneg %p80
        $region14: #{tpu_custom_call.1} parent=11 // pred_check_branch
          %151 = sbr.rel (%p149) target = $region16
        $region15: #{tpu_custom_call.1} parent=11 // pred_region
          %153 = vsyncadd [#allocation6], 0
          %s154 = smul.addr %s26, 8
          %s155 = scalar_lea.hbm %s1, %s154
          %s156 = sshll.u32 %s155, 4
          %s157 = int_to_ptr.hbm [resolvable:$true] %s156
          %s158 = sshll.u32 [#allocation5], 4
          %s159 = int_to_ptr.vmem [resolvable:$true] %s158
          %164 = dma.hbm_to_vmem [thread:$0]  %s157, 512, %s159, [#allocation6], 128, 128, 8
        $region16: #{tpu_custom_call.1} parent=11 // pred_fallthru
          _
        // Predicated region
        $region17: #{tpu_custom_call.1} parent=11 // pred_check
          %p165 = pneg %p106
        $region18: #{tpu_custom_call.1} parent=11 // pred_check_branch
          %167 = sbr.rel (%p165) target = $region20
        $region19: #{tpu_custom_call.1} parent=11 // pred_region
          %p168 = scmp.lt.s32.totalorder %s26, 0
          %s169 = scalar_select %p168, %s26, 0
          %s170 = scalar_lea.vmem %s2, %s169
        $region20: #{tpu_custom_call.1} parent=11 // pred_fallthru
          _
      $region12: #{tpu_custom_call.1} parent=5 // pred_fallthru
        _
      %p171 = scmp.lt.s32.totalorder %s16, 2
      // Predicated region
      $region21: #{tpu_custom_call.1} parent=5 // pred_check
        %p172 = pneg %p171
      $region22: #{tpu_custom_call.1} parent=5 // pred_check_branch
        %174 = sbr.rel (%p172) target = $region24
      $region23: #{tpu_custom_call.1} parent=5 // pred_region
        // Predicated region
        $region25: #{tpu_custom_call.1} parent=23 // pred_check
          %p175 = pneg %p48
        $region26: #{tpu_custom_call.1} parent=23 // pred_check_branch
          %177 = sbr.rel (%p175) target = $region28
        $region27: #{tpu_custom_call.1} parent=23 // pred_region
          %s178 = sand.u32 %s38, 1
          %s179 = scalar_lea.sflag [#allocation3], %s178
          %s180 = sand.u32 %s38, 1
          %s181 = smul.addr %s180, 8
          %s182 = scalar_lea.vmem [#allocation2], %s181
          %184 = vsyncadd %s179, 0
          %s185 = smul.addr %s23, 8
          %s186 = scalar_lea.hbm %s0, %s185
          %s188 = sshll.u32 %s186, 4
          %s189 = int_to_ptr.hbm [resolvable:$true] %s188
          %s190 = sshll.u32 %s182, 4
          %s191 = int_to_ptr.vmem [resolvable:$true] %s190
          %193 = dma.hbm_to_vmem [thread:$0]  %s189, 128, %s191, %s179
        $region28: #{tpu_custom_call.1} parent=23 // pred_fallthru
          _
      $region24: #{tpu_custom_call.1} parent=5 // pred_fallthru
        _
      %p194 = scmp.le.s32.totalorder 1, %s16
      %p195 = scmp.lt.s32.totalorder %s16, 3
      %p196 = pnand %p194, %p195
      %p197 = pneg %p196
      // Predicated region
      $region29: #{tpu_custom_call.1} parent=5 // pred_check
        _
      $region30: #{tpu_custom_call.1} parent=5 // pred_check_branch
        %199 = sbr.rel (%p196) target = $region32
      $region31: #{tpu_custom_call.1} parent=5 // pred_region
        %s200 = ssub.s32 %s16, 1
        %s201 = sand.u32 %s41, 1
        %s202 = scalar_lea.sflag [#allocation3], %s201
        %s203 = sand.u32 %s41, 1
        %s204 = smul.addr %s203, 8
        %s205 = scalar_lea.vmem [#allocation2], %s204
        // Predicated region
        $region33: #{tpu_custom_call.1} parent=31 // pred_check
          %p206 = pneg %p54
        $region34: #{tpu_custom_call.1} parent=31 // pred_check_branch
          %208 = sbr.rel (%p206) target = $region36
        $region35: #{tpu_custom_call.1} parent=31 // pred_region
          %210 = dma.done %s202, 128
        $region36: #{tpu_custom_call.1} parent=31 // pred_fallthru
          _
        // Predicated region
        $region37: #{tpu_custom_call.1} parent=31 // pred_check
          %p211 = pneg %p80
        $region38: #{tpu_custom_call.1} parent=31 // pred_check_branch
          %213 = sbr.rel (%p211) target = $region40
        $region39: #{tpu_custom_call.1} parent=31 // pred_region
          %215 = dma.done [#allocation6], 512
        $region40: #{tpu_custom_call.1} parent=31 // pred_fallthru
          _
        %s216 = sand.u32 %s41, 1
        %s217 = scalar_lea.sflag [#allocation3], %s216
        %s218 = sand.u32 %s41, 1
        %s219 = smul.addr %s218, 8
        %s220 = scalar_lea.vmem [#allocation2], %s219
        %p221 = pneg %p54
        %p222 = pneg %p51
        %p223 = pneg %p80
        %p224 = pneg %p77
        %p225 = scmp.lt.s32.totalorder %s26, 0
        %s226 = scalar_select %p225, %s26, 0
        %s227 = scalar_lea.vmem %s2, %s226
        %p228 = pneg %p106
        %p229 = pneg %p103
        %p230 = pneg %p134
        %p231 = pneg %p131
        %s232 = sand.u32 %s121, 1
        %s233 = scalar_lea.sflag [#allocation4], %s232
        %s234 = sand.u32 %s121, 1
        %s235 = smul.addr %s234, 8
        %s236 = scalar_lea.vmem [#allocation7], %s235
        %p237 = scmp.lt.s32.totalorder %s26, 0
        %s238 = scalar_select %p237, %s26, 0
        %s239 = scalar_lea.vmem %s2, %s238
        %v240 = vld [vmem:[%s205] sm:$0xff]
        %v241 = vld [vmem:[#allocation5] sm:$0xff]
        %v242 = vld [vmem:[#allocation5 + $0x8] sm:$0xff]
        %v243 = vld [vmem:[#allocation5 + $0x10] sm:$0xff]
        %v244 = vld [vmem:[#allocation5 + $0x18] sm:$0xff]
        %v245 = vld [vmem:[%s239] sm:$0x1]
        %v247 = vperm.slane %v245, 0
        %vm249 = vcmask 261120
        %v251 = vsel %vm249, %v240, 0
        %253 = vmatpush.msra.mxu0 0.0
        %254 = vmatpush.msra.mxu0 0.0
        %255 = vmatpush.msra.mxu0 0.0
        %256 = vmatpush.msra.mxu0 0.0
        %257 = vmatpush.msra.mxu0 0.0
        %258 = vmatpush.msra.mxu0 0.0
        %259 = vmatpush.msra.mxu0 0.0
        %260 = vmatpush.msra.mxu0 0.0
        %261 = vmatpush.msra.mxu0 0.0
        %262 = vmatpush.msra.mxu0 0.0
        %263 = vmatpush.msra.mxu0 0.0
        %264 = vmatpush.msra.mxu0 0.0
        %265 = vmatpush.msra.mxu0 %v244
        %266 = vmatpush.msra.mxu0 %v243
        %267 = vmatpush.msra.mxu0 %v242
        %268 = vmatpush.msra.mxu0 %v241
        %269 = vmatmul.f32.gmra.mxu0 %v251
        %v270 = vpop.f32.mrf.mxu0
        %v271 = vadd.f32 %v247, %v270
        %272 = vdwg.mxu0
        %v273 = vmul.f32 %v271, 20.0
        %274 = vst [vmem:[%s236] sm:$0xff] %v273
        %s275 = sand.u32 %s121, 1
        %s276 = scalar_lea.sflag [#allocation4], %s275
        %s277 = sand.u32 %s121, 1
        %s278 = smul.addr %s277, 8
        %s279 = scalar_lea.vmem [#allocation7], %s278
        // Predicated region
        $region41: #{tpu_custom_call.1} parent=31 // pred_check
          %p280 = pneg %p131
        $region42: #{tpu_custom_call.1} parent=31 // pred_check_branch
          %282 = sbr.rel (%p280) target = $region44
        $region43: #{tpu_custom_call.1} parent=31 // pred_region
          %284 = vsyncadd %s276, 0
          %s285 = sadd.s32 %s26, %s25
          %s286 = smul.addr %s285, 8
          %s287 = scalar_lea.hbm %s3, %s286
          %s289 = sshll.u32 %s279, 4
          %s290 = int_to_ptr.vmem [resolvable:$true] %s289
          %s291 = sshll.u32 %s287, 4
          %s292 = int_to_ptr.hbm [resolvable:$true] %s291
          %294 = dma.vmem_to_hbm [thread:$0]  %s290, 128, %s292, %s276
        $region44: #{tpu_custom_call.1} parent=31 // pred_fallthru
          _
      $region32: #{tpu_custom_call.1} parent=5 // pred_fallthru
        _
      %p295 = scmp.le.s32.totalorder 2, %s16
      // Predicated region
      $region45: #{tpu_custom_call.1} parent=5 // pred_check
        %p296 = pneg %p295
      $region46: #{tpu_custom_call.1} parent=5 // pred_check_branch
        %298 = sbr.rel (%p296) target = $region48
      $region47: #{tpu_custom_call.1} parent=5 // pred_region
        %s299 = ssub.s32 %s16, 2
        // Predicated region
        $region49: #{tpu_custom_call.1} parent=47 // pred_check
          %p300 = pneg %p137
        $region50: #{tpu_custom_call.1} parent=47 // pred_check_branch
          %302 = sbr.rel (%p300) target = $region52
        $region51: #{tpu_custom_call.1} parent=47 // pred_region
          %s303 = sand.u32 %s122, 1
          %s304 = scalar_lea.sflag [#allocation4], %s303
          %s305 = sand.u32 %s122, 1
          %s306 = smul.addr %s305, 8
          %s307 = scalar_lea.vmem [#allocation7], %s306
          %309 = dma.done %s304, 128
        $region52: #{tpu_custom_call.1} parent=47 // pred_fallthru
          _
      $region48: #{tpu_custom_call.1} parent=5 // pred_fallthru
        _
    $region6: #{tpu_custom_call.1} parent=1 // loop_footer
      %s20 = sadd.s32 1, %s16
    $region7: #{tpu_custom_call.1} parent=1 // loop_footer_branch
      %15 = sbr.rel target = $region3
    $region8: #{tpu_custom_call.1} parent=1 // loop_exit
      _
    %310 = vsyncpa [#allocation3], 1
    %s311 = scalar_lea.sflag [#allocation3], 1
    %312 = vsyncpa %s311, 1
    %313 = vsyncpa [#allocation6], 1
    %314 = vsyncpa [#allocation4], 1
    %s315 = scalar_lea.sflag [#allocation4], 1
    %316 = vsyncpa %s315, 1

</llo_original>
